<compile_context>
chip_gen: v6e
topology: v6e:2x2x1
jax: 0.10.0
libtpu: 0.0.40
codegen_flags: <defaults>
</compile_context>

<pallas_src>
import functools
import math

import numpy as np
import jax
import jax.numpy as jnp
from jax import lax
from jax.experimental import pallas as pl
from jax.experimental.pallas import tpu as pltpu


def _vmem_limit_bytes():
    # Per-generation scoped-VMEM cap (feedback: derive from hardware, not a hardcoded 32 MiB).
    try:
        cap = int(pltpu.get_tpu_info().vmem_capacity_bytes)
    except Exception:
        cap = 128 * 1024 * 1024
    return max(16 * 1024 * 1024, min(cap // 4, 64 * 1024 * 1024))


# ------------- Kernel 1: fused depthwise+pointwise conv (lane-dense) + partial BN stats -------------
def _fused_conv_stats_kernel(x_ref, w_ref, b_ref, y_ref, stats_ref, *,
                             KH, Ho, Cin, Cout, stride, r, G, valid_last):
    # x_ref:     (Hp, Wp*Cin)        bf16  one padded batch element, width*channels on lanes
    # w_ref:     (KH, WKC, r*Cout)   bf16  block-diagonal effective weights (KW taps folded in)
    # b_ref:     (1, r*Cout)         f32   lane-dense effective bias
    # y_ref:     (Ho, G*r*Cout)      bf16  lane-dense pre-BN output for this batch element
    # stats_ref: (2, r*Cout)         f32   row 0 = partial sum, row 1 = partial sum-of-squares
    LG = b_ref.shape[-1]            # r * Cout, a multiple of 128
    WKC = w_ref.shape[1]
    s_sum = jnp.zeros((1, LG), jnp.float32)
    s_ssq = jnp.zeros((1, LG), jnp.float32)
    for g in range(G):              # static unroll over lane-dense output column groups
        base = g * r * stride * Cin
        acc = jnp.zeros((Ho, LG), jnp.float32)
        for kh in range(KH):        # KW taps live inside w_ref's K axis -> only KH MXU dots
            if stride == 1:
                patch = x_ref[kh:kh + Ho, base:base + WKC]
            else:
                # TODO(synk): express the row stride at DMA/index_map time for stride > 1.
                patch = lax.slice(x_ref[...], (kh, base),
                                  (kh + (Ho - 1) * stride + 1, base + WKC), (stride, 1))
            acc += jnp.dot(patch, w_ref[kh], preferred_element_type=jnp.float32)
        acc += b_ref[...]
        y_ref[:, g * LG:(g + 1) * LG] = acc.astype(y_ref.dtype)   # unmasked full-lane store
        if g == G - 1 and valid_last < r:
            # Wo was padded up to a multiple of r: keep padded columns out of the BN stats.
            lane = lax.broadcasted_iota(jnp.int32, (1, LG), 1)
            msk = (lane < valid_last * Cout).astype(jnp.float32)
            s_sum += jnp.sum(acc, axis=0, keepdims=True) * msk
            s_ssq += jnp.sum(acc * acc, axis=0, keepdims=True) * msk
        else:
            s_sum += jnp.sum(acc, axis=0, keepdims=True)
            s_ssq += jnp.sum(acc * acc, axis=0, keepdims=True)
    stats_ref[0:1, :] = s_sum
    stats_ref[1:2, :] = s_ssq


# ------------------------------ Kernel 2: BN affine + ReLU (lane-dense) ------------------------------
def _bn_relu_kernel(y_ref, scale_ref, shift_ref, o_ref):
    o_ref[...] = jnp.maximum(
        y_ref[...].astype(jnp.float32) * scale_ref[...] + shift_ref[...], 0.0)


# ------------------------------------------------ Wrapper ------------------------------------------------
def separable_conv_bn_relu(x_nchw, params, *, stride, padding, eps=1e-5):
    w_dw = params["dw_w"]      # (Cin, 1, KH, KW)   PyTorch OIHW, groups=Cin
    b_dw = params["dw_b"]      # (Cin,)
    w_pw = params["pw_w"]      # (Cout, Cin, 1, 1)
    b_pw = params["pw_b"]      # (Cout,)
    gamma = params["bn_g"]     # (Cout,)
    beta = params["bn_b"]      # (Cout,)

    N, Cin, H, W = x_nchw.shape
    Cout = w_pw.shape[0]
    KH, KW = w_dw.shape[2], w_dw.shape[3]
    Ho = (H + 2 * padding - KH) // stride + 1
    Wo = (W + 2 * padding - KW) // stride + 1
    Hp = H + 2 * padding

    # Lane-dense packing: r output columns x Cout channels span a multiple of 128 lanes.
    r = 128 // math.gcd(Cout, 128)
    pad_cols = (-Wo) % r
    WoP = Wo + pad_cols                        # padded output width (multiple of r)
    valid_last = r - pad_cols if pad_cols else r
    G = WoP // r                               # number of lane-dense output column groups
    LG = r * Cout
    WKC = ((r - 1) * stride + KW) * Cin        # K of each per-kh block-diagonal matmul
    Wp = max(W + 2 * padding, (WoP - 1) * stride + KW)

    # --- glue: bf16 cast BEFORE transpose/pad (halves those passes), then (N, Hp, Wp*Cin) ---
    x_bf = x_nchw.astype(jnp.bfloat16)
    x_nhwc = jnp.transpose(x_bf, (0, 2, 3, 1))
    xp = jnp.pad(x_nhwc, ((0, 0), (padding, padding),
                          (padding, Wp - W - padding), (0, 0)))
    x2 = xp.reshape(N, Hp, Wp * Cin)

    # --- glue: block-diagonal effective weights (depthwise folded into the pointwise) ---
    dw = w_dw[:, 0]                                           # (Cin, KH, KW)
    pw = jnp.transpose(w_pw[:, :, 0, 0], (1, 0))              # (Cin, Cout)
    w_eff = jnp.einsum('ihw,io->hwio', dw, pw)                # (KH, KW, Cin, Cout), f32
    onehot = np.zeros((KW, Cin, r, WKC), np.float32)          # static scatter pattern
    for kw in range(KW):
        for ci in range(Cin):
            for j in range(r):
                onehot[kw, ci, j, (j * stride + kw) * Cin + ci] = 1.0
    w_bd = jnp.einsum('kwic,wijp->kpjc', w_eff, onehot)
    w_bd = w_bd.reshape(KH, WKC, LG).astype(jnp.bfloat16)     # MXU operand
    # TODO(synk): bf16 matmul operands bound accuracy to ~1e-2 vs the f32 module; offer an
    # f32-operand fallback for accuracy-sensitive configs.
    b_eff = (b_dw @ pw + b_pw).astype(jnp.float32)
    b_lane = jnp.tile(b_eff.reshape(1, Cout), (1, r))         # (1, LG)

    vlim = _vmem_limit_bytes()

    # --- fused conv + per-step partial BN stats, one padded batch element per grid step ---
    # TODO(synk): for large H*W add a halo'd output-row grid axis so the per-step block stays
    # bounded on v7x's 64 MiB VMEM and the pipeline gets more than N steps of overlap.
    flops1 = 2 * N * Ho * Wo * KH * KW * Cin * Cout
    bytes1 = (x2.size * 2 + w_bd.size * 2 + b_lane.size * 4
              + N * Ho * WoP * Cout * 2 + N * 2 * LG * 4)
    y, stats = pl.pallas_call(
        functools.partial(_fused_conv_stats_kernel, KH=KH, Ho=Ho, Cin=Cin, Cout=Cout,
                          stride=stride, r=r, G=G, valid_last=valid_last),
        out_shape=(
            jax.ShapeDtypeStruct((N, Ho, WoP * Cout), jnp.bfloat16),   # bf16 pre-BN buffer
            jax.ShapeDtypeStruct((N, 2, LG), jnp.float32),             # packed partial stats
        ),
        grid=(N,),
        in_specs=[
            pl.BlockSpec((None, Hp, Wp * Cin), lambda n: (n, 0, 0)),
            pl.BlockSpec((KH, WKC, LG), lambda n: (0, 0, 0)),
            pl.BlockSpec((1, LG), lambda n: (0, 0)),
        ],
        out_specs=(
            pl.BlockSpec((None, Ho, WoP * Cout), lambda n: (n, 0, 0)),
            pl.BlockSpec((None, 2, LG), lambda n: (n, 0, 0)),
        ),
        compiler_params=pltpu.CompilerParams(
            dimension_semantics=("parallel",), vmem_limit_bytes=vlim),
        cost_estimate=pl.CostEstimate(flops=flops1, transcendentals=0,
                                      bytes_accessed=bytes1),
    )(x2, w_bd, b_lane)

    # --- tiny per-channel BN coefficients (training-mode batch statistics, biased variance) ---
    # TODO(synk): BatchNorm2d running_mean/running_var momentum updates are stateful and do not
    # affect this forward output; they are not reproduced here.
    M = N * Ho * Wo
    psum = jnp.sum(stats[:, 0, :], axis=0).reshape(r, Cout).sum(axis=0)
    pssq = jnp.sum(stats[:, 1, :], axis=0).reshape(r, Cout).sum(axis=0)
    mean = psum / M
    # TODO(synk): E[y^2]-E[y]^2 can cancel for very large M; a Welford-style combine of the
    # per-step partials would be more robust. Clamp keeps the variance non-negative.
    var = jnp.maximum(pssq / M - mean * mean, 0.0)
    scale = gamma * lax.rsqrt(var + eps)
    shift = beta - mean * scale

    # --- BN affine + ReLU over a lane-widened view (128..1024-lane unmasked stores) ---
    M2 = N * Ho
    LW0 = WoP * Cout
    kf = max((k for k in (8, 4, 2, 1) if M2 % k == 0 and LW0 * k <= 1024), default=1)
    Mf, LW = M2 // kf, LW0 * kf
    y2 = y.reshape(Mf, LW)                                    # contiguous reshape: free
    scale_l = jnp.tile(scale.reshape(1, Cout), (1, WoP * kf))
    shift_l = jnp.tile(shift.reshape(1, Cout), (1, WoP * kf))
    tm = min(512, Mf)
    flops2 = 3 * Mf * LW
    bytes2 = Mf * LW * 2 + Mf * LW * 4 + 2 * LW * 4
    out2 = pl.pallas_call(
        _bn_relu_kernel,
        out_shape=jax.ShapeDtypeStruct((Mf, LW), jnp.float32),
        grid=(pl.cdiv(Mf, tm),),
        in_specs=[
            pl.BlockSpec((tm, LW), lambda i: (i, 0)),
            pl.BlockSpec((1, LW), lambda i: (0, 0)),
            pl.BlockSpec((1, LW), lambda i: (0, 0)),
        ],
        out_specs=pl.BlockSpec((tm, LW), lambda i: (i, 0)),
        compiler_params=pltpu.CompilerParams(
            dimension_semantics=("parallel",), vmem_limit_bytes=vlim),
        cost_estimate=pl.CostEstimate(flops=flops2, transcendentals=0,
                                      bytes_accessed=bytes2),
    )(y2, scale_l, shift_l)

    # --- glue: drop padded output columns, back to NCHW ---
    # TODO(synk): fold this NHWC->NCHW transpose into kernel 2's out_spec to save one HBM pass.
    out_nhwc = out2.reshape(N, Ho, WoP, Cout)[:, :, :Wo, :]
    return jnp.transpose(out_nhwc, (0, 3, 1, 2))


# ------------------------------- pure-JAX reference (correctness check) -------------------------------
def _reference(x_nchw, params, *, stride, padding, eps=1e-5):
    w_dw, b_dw = params["dw_w"], params["dw_b"]
    w_pw, b_pw = params["pw_w"], params["pw_b"]
    gamma, beta = params["bn_g"], params["bn_b"]
    Cin = x_nchw.shape[1]
    dw = lax.conv_general_dilated(
        x_nchw, w_dw, (stride, stride), [(padding, padding)] * 2,
        feature_group_count=Cin, dimension_numbers=("NCHW", "OIHW", "NCHW"),
    ) + b_dw.reshape(1, -1, 1, 1)
    pw = lax.conv_general_dilated(
        dw, w_pw, (1, 1), "VALID", dimension_numbers=("NCHW", "OIHW", "NCHW"),
    ) + b_pw.reshape(1, -1, 1, 1)
    mean = pw.mean(axis=(0, 2, 3), keepdims=True)
    var = pw.var(axis=(0, 2, 3), keepdims=True)   # biased, as in BN training forward
    y = (pw - mean) * lax.rsqrt(var + eps) * gamma.reshape(1, -1, 1, 1) + beta.reshape(1, -1, 1, 1)
    return jnp.maximum(y, 0.0)


if __name__ == "__main__":
    # module config: SeparableConvBNReLU(in_channels=4, out_channels=8,
    #                                    kernel_size=3, stride=1, padding=1, bias=True)
    N, Cin, H, W = 2, 4, 16, 16
    Cout, K, stride, padding = 8, 3, 1, 1

    key = jax.random.PRNGKey(0)
    k = jax.random.split(key, 7)
    x = jax.random.normal(k[0], (N, Cin, H, W), jnp.float32)
    params = {
        "dw_w": jax.random.normal(k[1], (Cin, 1, K, K), jnp.float32) * 0.2,
        "dw_b": jax.random.normal(k[2], (Cin,), jnp.float32) * 0.1,
        "pw_w": jax.random.normal(k[3], (Cout, Cin, 1, 1), jnp.float32) * 0.2,
        "pw_b": jax.random.normal(k[4], (Cout,), jnp.float32) * 0.1,
        "bn_g": 1.0 + 0.1 * jax.random.normal(k[5], (Cout,), jnp.float32),
        "bn_b": 0.1 * jax.random.normal(k[6], (Cout,), jnp.float32),
    }

    fwd = jax.jit(functools.partial(separable_conv_bn_relu, stride=stride, padding=padding))
    out = jax.block_until_ready(fwd(x, params))

    ref = _reference(x, params, stride=stride, padding=padding)
    assert out.shape == (N, Cout, H, W), out.shape
    # bf16 MXU operands + bf16 pre-BN buffer (f32 accumulation/statistics) + BN normalization
    # give ~1e-2 worst-case error vs the f32 reference; 5e-2 is a comfortable bound.
    assert jnp.max(jnp.abs(out - ref)) < 5e-2, float(jnp.max(jnp.abs(out - ref)))

    print("KERNEL_OK")
</pallas_src>

<mosaic_0001>
module attributes {stable_mosaic.version = 11 : i64} {
  func.func @_fused_conv_stats_kernel(%arg0: i32, %arg1: memref<1x18x72xbf16, #tpu.memory_space<vmem>>, %arg2: memref<3x72x128xbf16, #tpu.memory_space<vmem>>, %arg3: memref<1x128xf32, #tpu.memory_space<vmem>>, %arg4: memref<1x16x128xbf16, #tpu.memory_space<vmem>>, %arg5: memref<1x2x128xf32, #tpu.memory_space<vmem>>) attributes {dimension_semantics = [#tpu.dimension_semantics<parallel>], iteration_bounds = array<i64: 2>, scalar_prefetch = 0 : i64, scratch_operands = 0 : i64, tpu.core_type = #tpu.core_type<tc>, window_params = [{transform_indices = @transform_0, window_bounds = array<i64: 1, 18, 72>}, {pipeline_mode = #tpu.pipeline_mode<synchronous>, transform_indices = @transform_1, window_bounds = array<i64: 3, 72, 128>}, {pipeline_mode = #tpu.pipeline_mode<synchronous>, transform_indices = @transform_2, window_bounds = array<i64: 1, 128>}, {transform_indices = @transform_3, window_bounds = array<i64: 1, 16, 128>}, {transform_indices = @transform_4, window_bounds = array<i64: 1, 2, 128>}]} {
    %cst = arith.constant 0.000000e+00 : f32
    %0 = vector.broadcast %cst : f32 to vector<1x128xf32>
    %cst_0 = arith.constant 0.000000e+00 : f32
    %1 = vector.broadcast %cst_0 : f32 to vector<1x128xf32>
    %cst_1 = arith.constant 0.000000e+00 : f32
    %2 = vector.broadcast %cst_1 : f32 to vector<16x128xf32>
    %c0 = arith.constant 0 : index
    %c0_2 = arith.constant 0 : index
    %c0_3 = arith.constant 0 : index
    %3 = vector.load %arg1[%c0, %c0_2, %c0_3] : memref<1x18x72xbf16, #tpu.memory_space<vmem>>, vector<1x16x72xbf16>
    %4 = vector.shape_cast %3 : vector<1x16x72xbf16> to vector<16x72xbf16>
    %c0_4 = arith.constant 0 : index
    %c0_5 = arith.constant 0 : index
    %c0_6 = arith.constant 0 : index
    %5 = vector.load %arg2[%c0_4, %c0_5, %c0_6] : memref<3x72x128xbf16, #tpu.memory_space<vmem>>, vector<1x72x128xbf16>
    %6 = vector.shape_cast %5 : vector<1x72x128xbf16> to vector<72x128xbf16>
    %cst_7 = arith.constant dense<0.000000e+00> : vector<16x128xf32>
    %7 = tpu.matmul %4, %6, %cst_7 {dimension_numbers = #tpu.dot_dimension_numbers<[1], [0], [0], [1], [0, 0, 1, 1], [], []>} : vector<16x72xbf16>, vector<72x128xbf16>, vector<16x128xf32> -> vector<16x128xf32>
    %8 = arith.addf %2, %7 : vector<16x128xf32>
    %c0_8 = arith.constant 0 : index
    %c1 = arith.constant 1 : index
    %c0_9 = arith.constant 0 : index
    %9 = vector.load %arg1[%c0_8, %c1, %c0_9] : memref<1x18x72xbf16, #tpu.memory_space<vmem>>, vector<1x16x72xbf16>
    %10 = vector.shape_cast %9 : vector<1x16x72xbf16> to vector<16x72xbf16>
    %c1_10 = arith.constant 1 : index
    %c0_11 = arith.constant 0 : index
    %c0_12 = arith.constant 0 : index
    %11 = vector.load %arg2[%c1_10, %c0_11, %c0_12] : memref<3x72x128xbf16, #tpu.memory_space<vmem>>, vector<1x72x128xbf16>
    %12 = vector.shape_cast %11 : vector<1x72x128xbf16> to vector<72x128xbf16>
    %cst_13 = arith.constant dense<0.000000e+00> : vector<16x128xf32>
    %13 = tpu.matmul %10, %12, %cst_13 {dimension_numbers = #tpu.dot_dimension_numbers<[1], [0], [0], [1], [0, 0, 1, 1], [], []>} : vector<16x72xbf16>, vector<72x128xbf16>, vector<16x128xf32> -> vector<16x128xf32>
    %14 = arith.addf %8, %13 : vector<16x128xf32>
    %c0_14 = arith.constant 0 : index
    %c2 = arith.constant 2 : index
    %c0_15 = arith.constant 0 : index
    %15 = vector.load %arg1[%c0_14, %c2, %c0_15] : memref<1x18x72xbf16, #tpu.memory_space<vmem>>, vector<1x16x72xbf16>
    %16 = vector.shape_cast %15 : vector<1x16x72xbf16> to vector<16x72xbf16>
    %c2_16 = arith.constant 2 : index
    %c0_17 = arith.constant 0 : index
    %c0_18 = arith.constant 0 : index
    %17 = vector.load %arg2[%c2_16, %c0_17, %c0_18] : memref<3x72x128xbf16, #tpu.memory_space<vmem>>, vector<1x72x128xbf16>
    %18 = vector.shape_cast %17 : vector<1x72x128xbf16> to vector<72x128xbf16>
    %cst_19 = arith.constant dense<0.000000e+00> : vector<16x128xf32>
    %19 = tpu.matmul %16, %18, %cst_19 {dimension_numbers = #tpu.dot_dimension_numbers<[1], [0], [0], [1], [0, 0, 1, 1], [], []>} : vector<16x72xbf16>, vector<72x128xbf16>, vector<16x128xf32> -> vector<16x128xf32>
    %20 = arith.addf %14, %19 : vector<16x128xf32>
    %c0_20 = arith.constant 0 : index
    %c0_21 = arith.constant 0 : index
    %21 = vector.load %arg3[%c0_20, %c0_21] : memref<1x128xf32, #tpu.memory_space<vmem>>, vector<1x128xf32>
    %22 = vector.broadcast %21 : vector<1x128xf32> to vector<16x128xf32>
    %23 = arith.addf %20, %22 : vector<16x128xf32>
    %24 = arith.truncf %23 : vector<16x128xf32> to vector<16x128xbf16>
    %c0_22 = arith.constant 0 : index
    %c0_23 = arith.constant 0 : index
    %c0_24 = arith.constant 0 : index
    %25 = vector.load %arg4[%c0_22, %c0_23, %c0_24] : memref<1x16x128xbf16, #tpu.memory_space<vmem>>, vector<1x16x128xbf16>
    %26 = vector.shape_cast %25 : vector<1x16x128xbf16> to vector<16x128xbf16>
    %27 = vector.shape_cast %24 : vector<16x128xbf16> to vector<1x16x128xbf16>
    tpu.vector_store %arg4[%c0_22, %c0_23, %c0_24], %27 {strides = array<i32>} : memref<1x16x128xbf16, #tpu.memory_space<vmem>>, vector<1x16x128xbf16>,
    %cst_25 = arith.constant dense<0.000000e+00> : vector<128xf32>
    %28 = vector.multi_reduction <add>, %23, %cst_25 [0] : vector<16x128xf32> to vector<128xf32>
    %29 = vector.shape_cast %28 : vector<128xf32> to vector<1x128xf32>
    %30 = arith.addf %0, %29 : vector<1x128xf32>
    %31 = arith.mulf %23, %23 : vector<16x128xf32>
    %cst_26 = arith.constant dense<0.000000e+00> : vector<128xf32>
    %32 = vector.multi_reduction <add>, %31, %cst_26 [0] : vector<16x128xf32> to vector<128xf32>
    %33 = vector.shape_cast %32 : vector<128xf32> to vector<1x128xf32>
    %34 = arith.addf %1, %33 : vector<1x128xf32>
    %c0_27 = arith.constant 0 : index
    %c0_28 = arith.constant 0 : index
    %c0_29 = arith.constant 0 : index
    %35 = vector.load %arg5[%c0_27, %c0_28, %c0_29] : memref<1x2x128xf32, #tpu.memory_space<vmem>>, vector<1x1x128xf32>
    %36 = vector.shape_cast %35 : vector<1x1x128xf32> to vector<1x128xf32>
    %37 = vector.shape_cast %30 : vector<1x128xf32> to vector<1x1x128xf32>
    tpu.vector_store %arg5[%c0_27, %c0_28, %c0_29], %37 {strides = array<i32>} : memref<1x2x128xf32, #tpu.memory_space<vmem>>, vector<1x1x128xf32>,
    %c0_30 = arith.constant 0 : index
    %c1_31 = arith.constant 1 : index
    %c0_32 = arith.constant 0 : index
    %38 = vector.load %arg5[%c0_30, %c1_31, %c0_32] : memref<1x2x128xf32, #tpu.memory_space<vmem>>, vector<1x1x128xf32>
    %39 = vector.shape_cast %38 : vector<1x1x128xf32> to vector<1x128xf32>
    %40 = vector.shape_cast %34 : vector<1x128xf32> to vector<1x1x128xf32>
    tpu.vector_store %arg5[%c0_30, %c1_31, %c0_32], %40 {strides = array<i32>} : memref<1x2x128xf32, #tpu.memory_space<vmem>>, vector<1x1x128xf32>,
    return
  }
  func.func @transform_0(%arg0: i32) -> (i32, i32, i32) {
    %c0_i32 = arith.constant 0 : i32
    %c0_i32_0 = arith.constant 0 : i32
    %c0_i32_1 = arith.constant 0 : i32
    return %arg0, %c0_i32, %c0_i32_0 : i32, i32, i32
  }
  func.func @transform_1(%arg0: i32) -> (i32, i32, i32) {
    %c0_i32 = arith.constant 0 : i32
    %c0_i32_0 = arith.constant 0 : i32
    %c0_i32_1 = arith.constant 0 : i32
    %c0_i32_2 = arith.constant 0 : i32
    return %c0_i32, %c0_i32_0, %c0_i32_1 : i32, i32, i32
  }
  func.func @transform_2(%arg0: i32) -> (i32, i32) {
    %c0_i32 = arith.constant 0 : i32
    %c0_i32_0 = arith.constant 0 : i32
    %c0_i32_1 = arith.constant 0 : i32
    return %c0_i32, %c0_i32_0 : i32, i32
  }
  func.func @transform_3(%arg0: i32) -> (i32, i32, i32) {
    %c0_i32 = arith.constant 0 : i32
    %c0_i32_0 = arith.constant 0 : i32
    %c0_i32_1 = arith.constant 0 : i32
    return %arg0, %c0_i32, %c0_i32_0 : i32, i32, i32
  }
  func.func @transform_4(%arg0: i32) -> (i32, i32, i32) {
    %c0_i32 = arith.constant 0 : i32
    %c0_i32_0 = arith.constant 0 : i32
    %c0_i32_1 = arith.constant 0 : i32
    return %arg0, %c0_i32, %c0_i32_0 : i32, i32, i32
  }
}

module attributes {stable_mosaic.version = 11 : i64} {
  func.func @_bn_relu_kernel(%arg0: i32, %arg1: memref<4x1024xbf16, #tpu.memory_space<vmem>>, %arg2: memref<1x1024xf32, #tpu.memory_space<vmem>>, %arg3: memref<1x1024xf32, #tpu.memory_space<vmem>>, %arg4: memref<4x1024xf32, #tpu.memory_space<vmem>>) attributes {dimension_semantics = [#tpu.dimension_semantics<parallel>], iteration_bounds = array<i64: 1>, scalar_prefetch = 0 : i64, scratch_operands = 0 : i64, tpu.core_type = #tpu.core_type<tc>, window_params = [{transform_indices = @transform_0, window_bounds = array<i64: 4, 1024>}, {pipeline_mode = #tpu.pipeline_mode<synchronous>, transform_indices = @transform_1, window_bounds = array<i64: 1, 1024>}, {pipeline_mode = #tpu.pipeline_mode<synchronous>, transform_indices = @transform_2, window_bounds = array<i64: 1, 1024>}, {transform_indices = @transform_3, window_bounds = array<i64: 4, 1024>}]} {
    %c0 = arith.constant 0 : index
    %c0_0 = arith.constant 0 : index
    %0 = vector.load %arg1[%c0, %c0_0] : memref<4x1024xbf16, #tpu.memory_space<vmem>>, vector<4x1024xbf16>
    %1 = arith.extf %0 : vector<4x1024xbf16> to vector<4x1024xf32>
    %c0_1 = arith.constant 0 : index
    %c0_2 = arith.constant 0 : index
    %2 = vector.load %arg2[%c0_1, %c0_2] : memref<1x1024xf32, #tpu.memory_space<vmem>>, vector<1x1024xf32>
    %3 = vector.broadcast %2 : vector<1x1024xf32> to vector<4x1024xf32>
    %4 = arith.mulf %1, %3 : vector<4x1024xf32>
    %c0_3 = arith.constant 0 : index
    %c0_4 = arith.constant 0 : index
    %5 = vector.load %arg3[%c0_3, %c0_4] : memref<1x1024xf32, #tpu.memory_space<vmem>>, vector<1x1024xf32>
    %6 = vector.broadcast %5 : vector<1x1024xf32> to vector<4x1024xf32>
    %7 = arith.addf %4, %6 : vector<4x1024xf32>
    %cst = arith.constant 0.000000e+00 : f32
    %8 = vector.broadcast %cst : f32 to vector<4x1024xf32>
    %9 = arith.maximumf %7, %8 : vector<4x1024xf32>
    %c0_5 = arith.constant 0 : index
    %c0_6 = arith.constant 0 : index
    %10 = vector.load %arg4[%c0_5, %c0_6] : memref<4x1024xf32, #tpu.memory_space<vmem>>, vector<4x1024xf32>
    tpu.vector_store %arg4[%c0_5, %c0_6], %9 {strides = array<i32>} : memref<4x1024xf32, #tpu.memory_space<vmem>>, vector<4x1024xf32>,
    return
  }
  func.func @transform_0(%arg0: i32) -> (i32, i32) {
    %c0_i32 = arith.constant 0 : i32
    %c0_i32_0 = arith.constant 0 : i32
    return %arg0, %c0_i32 : i32, i32
  }
  func.func @transform_1(%arg0: i32) -> (i32, i32) {
    %c0_i32 = arith.constant 0 : i32
    %c0_i32_0 = arith.constant 0 : i32
    %c0_i32_1 = arith.constant 0 : i32
    return %c0_i32, %c0_i32_0 : i32, i32
  }
  func.func @transform_2(%arg0: i32) -> (i32, i32) {
    %c0_i32 = arith.constant 0 : i32
    %c0_i32_0 = arith.constant 0 : i32
    %c0_i32_1 = arith.constant 0 : i32
    return %c0_i32, %c0_i32_0 : i32, i32
  }
  func.func @transform_3(%arg0: i32) -> (i32, i32) {
    %c0_i32 = arith.constant 0 : i32
    %c0_i32_0 = arith.constant 0 : i32
    return %arg0, %c0_i32 : i32, i32
  }
}

</mosaic_0001>

<llo_original>
// kernel: separable_conv_bn_relu.3
$region0: #{separable_conv_bn_relu.3}
  #allocation0 [shape = 'u32[]', space=smem, size = 0x4, offset = 0x4, fixed_abs, tag = 'smem constant byte address 0x4 - core index']
  #allocation1 [shape = 'u32[144,128]{1,0:T(1,128)}', space=vmem, size = 0x12000, scoped, tag = 'internal scratch']
  %s0 = inlined_call_operand.vmem [shape: bf16[4,1024], index: 0, kind: input, shape index: {}]
  %s1 = inlined_call_operand.vmem [shape: f32[1,1024], index: 1, kind: input, shape index: {}]
  %s2 = inlined_call_operand.vmem [shape: f32[1,1024], index: 2, kind: input, shape index: {}]
  %s3 = inlined_call_operand.vmem [shape: f32[4,1024], index: 3, kind: output, shape index: {}]
  %s4 = sld [smem:[#allocation0]]
  $region22: #{separable_conv_bn_relu.3} parent=0
    _
  %s6 = ssub.s32 1, %s4
  %s7 = scalar_select 0, %s6, %s4
  // Predicated region
  $region2: #{separable_conv_bn_relu.3} parent=0 // pred_check
    _
  $region3: #{separable_conv_bn_relu.3} parent=0 // pred_check_branch
    %9 = sbr.rel (0) target = $region5
  $region4: #{separable_conv_bn_relu.3} parent=0 // pred_region
    _
  $region5: #{separable_conv_bn_relu.3} parent=0 // pred_fallthru
    _
  // Predicated region
  $region6: #{separable_conv_bn_relu.3} parent=0 // pred_check
    _
  $region7: #{separable_conv_bn_relu.3} parent=0 // pred_check_branch
    %11 = sbr.rel (0) target = $region9
  $region8: #{separable_conv_bn_relu.3} parent=0 // pred_region
    _
  $region9: #{separable_conv_bn_relu.3} parent=0 // pred_fallthru
    _
  // Predicated region
  $region10: #{separable_conv_bn_relu.3} parent=0 // pred_check
    _
  $region11: #{separable_conv_bn_relu.3} parent=0 // pred_check_branch
    %13 = sbr.rel (0) target = $region13
  $region12: #{separable_conv_bn_relu.3} parent=0 // pred_region
    _
  $region13: #{separable_conv_bn_relu.3} parent=0 // pred_fallthru
    _
  %v14 = vld [vmem:[%s0] sm:$0xff]
  %v15 = vld [vmem:[%s0 + $0x8] sm:$0xff]
  %v16 = vunpack.c.l.bf16 %v14
  %v17 = vunpack.c.h.bf16 %v14
  %v18 = vunpack.c.l.bf16 %v15
  %v19 = vunpack.c.h.bf16 %v15
  %v20 = vld [vmem:[%s1] sm:$0xff]
  %v22 = vlaneseq
  %v23 = vshrl.u32 %v22, 7
  %v24 = vsub.s32 0, %v23
  %v25 = vrot.slane %v20, %v24
  %v26 = vlaneseq
  %v27 = vshrl.u32 %v26, 7
  %v28 = vsub.s32 1, %v27
  %v29 = vrot.slane %v20, %v28
  %v30 = vlaneseq
  %v31 = vshrl.u32 %v30, 7
  %v32 = vsub.s32 2, %v31
  %v33 = vrot.slane %v20, %v32
  %v34 = vlaneseq
  %v35 = vshrl.u32 %v34, 7
  %v36 = vsub.s32 3, %v35
  %v37 = vrot.slane %v20, %v36
  %v38 = vlaneseq
  %v39 = vshrl.u32 %v38, 7
  %v40 = vsub.s32 4, %v39
  %v41 = vrot.slane %v20, %v40
  %v42 = vlaneseq
  %v43 = vshrl.u32 %v42, 7
  %v44 = vsub.s32 5, %v43
  %v45 = vrot.slane %v20, %v44
  %v46 = vlaneseq
  %v47 = vshrl.u32 %v46, 7
  %v48 = vsub.s32 6, %v47
  %v49 = vrot.slane %v20, %v48
  %v50 = vlaneseq
  %v51 = vshrl.u32 %v50, 7
  %v52 = vsub.s32 7, %v51
  %v53 = vrot.slane %v20, %v52
  %v54 = vcombine.low %v25, %v29
  %v55 = vcombine.low %v33, %v37
  %v56 = vcombine.low %v41, %v45
  %v57 = vcombine.low %v49, %v53
  %v62 = vmul.f32 %v16, %v54
  %v63 = vmul.f32 %v17, %v55
  %v64 = vmul.f32 %v18, %v56
  %v65 = vmul.f32 %v19, %v57
  %v66 = vld [vmem:[%s2] sm:$0xff]
  %v68 = vlaneseq
  %v69 = vshrl.u32 %v68, 7
  %v70 = vsub.s32 0, %v69
  %v71 = vrot.slane %v66, %v70
  %v72 = vlaneseq
  %v73 = vshrl.u32 %v72, 7
  %v74 = vsub.s32 1, %v73
  %v75 = vrot.slane %v66, %v74
  %v76 = vlaneseq
  %v77 = vshrl.u32 %v76, 7
  %v78 = vsub.s32 2, %v77
  %v79 = vrot.slane %v66, %v78
  %v80 = vlaneseq
  %v81 = vshrl.u32 %v80, 7
  %v82 = vsub.s32 3, %v81
  %v83 = vrot.slane %v66, %v82
  %v84 = vlaneseq
  %v85 = vshrl.u32 %v84, 7
  %v86 = vsub.s32 4, %v85
  %v87 = vrot.slane %v66, %v86
  %v88 = vlaneseq
  %v89 = vshrl.u32 %v88, 7
  %v90 = vsub.s32 5, %v89
  %v91 = vrot.slane %v66, %v90
  %v92 = vlaneseq
  %v93 = vshrl.u32 %v92, 7
  %v94 = vsub.s32 6, %v93
  %v95 = vrot.slane %v66, %v94
  %v96 = vlaneseq
  %v97 = vshrl.u32 %v96, 7
  %v98 = vsub.s32 7, %v97
  %v99 = vrot.slane %v66, %v98
  %v100 = vcombine.low %v71, %v75
  %v101 = vcombine.low %v79, %v83
  %v102 = vcombine.low %v87, %v91
  %v103 = vcombine.low %v95, %v99
  %v108 = vadd.f32 %v62, %v100
  %v109 = vadd.f32 %v63, %v101
  %v110 = vadd.f32 %v64, %v102
  %v111 = vadd.f32 %v65, %v103
  %v112 = vmax.f32 %v108, 0.0
  %v113 = vmax.f32 %v109, 0.0
  %v114 = vmax.f32 %v110, 0.0
  %v115 = vmax.f32 %v111, 0.0
  %116 = vst [vmem:[%s3] sm:$0xff] %v112
  %117 = vst [vmem:[%s3 + $0x8] sm:$0xff] %v113
  %118 = vst [vmem:[%s3 + $0x10] sm:$0xff] %v114
  %119 = vst [vmem:[%s3 + $0x18] sm:$0xff] %v115
  // Predicated region
  $region14: #{separable_conv_bn_relu.3} parent=0 // pred_check
    _
  $region15: #{separable_conv_bn_relu.3} parent=0 // pred_check_branch
    %121 = sbr.rel (0) target = $region17
  $region16: #{separable_conv_bn_relu.3} parent=0 // pred_region
    _
  $region17: #{separable_conv_bn_relu.3} parent=0 // pred_fallthru
    _
  // Predicated region
  $region18: #{separable_conv_bn_relu.3} parent=0 // pred_check
    _
  $region19: #{separable_conv_bn_relu.3} parent=0 // pred_check_branch
    %123 = sbr.rel (0) target = $region21
  $region20: #{separable_conv_bn_relu.3} parent=0 // pred_region
    _
  $region21: #{separable_conv_bn_relu.3} parent=0 // pred_fallthru
    _

// kernel: separable_conv_bn_relu.2
$region0: #{separable_conv_bn_relu.2}
  #allocation0 [shape = 'u32[]', space=smem, size = 0x4, offset = 0x4, fixed_abs, tag = 'smem constant byte address 0x4 - core index']
  #allocation1 [shape = 'u32[144,128]{1,0:T(1,128)}', space=vmem, size = 0x12000, scoped, tag = 'internal scratch']
  %s0 = inlined_call_operand.vmem [shape: bf16[2,18,72], index: 0, kind: input, shape index: {}]
  %s1 = inlined_call_operand.vmem [shape: bf16[3,72,128], index: 1, kind: input, shape index: {}]
  %s2 = inlined_call_operand.vmem [shape: f32[1,128], index: 2, kind: input, shape index: {}]
  %s3 = inlined_call_operand.vmem [shape: bf16[2,16,128], index: 3, kind: output, shape index: {0}]
  %s4 = inlined_call_operand.vmem [shape: f32[2,2,128], index: 4, kind: output, shape index: {1}]
  %5 = xla_tuple %s3, %s4
  %s6 = sld [smem:[#allocation0]]
  $region53: #{separable_conv_bn_relu.2} parent=0
    _
  %s8 = ssub.s32 1, %s6
  %s9 = scalar_select 0, %s8, %s6
  loop: start=0, step=1, limit=4
  $region2: #{separable_conv_bn_relu.2} parent=0 // loop_pre_header
    _
  $region3: #{separable_conv_bn_relu.2} parent=0 // loop_header
    %s11 = sphi 0, %s15
    %p12 = scmp.ge.s32.totalorder %s11, 4
    %s21 = sphi 0, %s23
    %s24 = sphi 0, %s21
    %s25 = sphi 0, %s24
    %s41 = sphi 0, %s25
    %s45 = sphi 0, %s45
    %s47 = sphi 0, %s45
    %s48 = sphi 0, %s47
    %s62 = sphi 0, %s48
    %s66 = sphi 0, %s66
    %s68 = sphi 0, %s66
    %s69 = sphi 0, %s68
    %s83 = sphi 0, %s69
    %s89 = sphi 0, %s91
    %s92 = sphi 0, %s89
    %s93 = sphi 0, %s92
    %s109 = sphi 0, %s93
    %s115 = sphi 0, %s117
    %s118 = sphi 0, %s115
    %s119 = sphi 0, %s118
    %s135 = sphi 0, %s119
  $region4: #{separable_conv_bn_relu.2} parent=0 // loop_header_branch
    %14 = sbr.rel (%p12) target = $region8
  $region5: #{separable_conv_bn_relu.2} parent=0 // loop_body
    %s16 = ssub.s32 %s11, 1
    %s17 = ssub.s32 %s11, 2
    %s18 = sadd.s32 %s11, 1
    %s19 = ssub.s32 %s11, %s18
    %p20 = scmp.eq.s32.totalorder %s19, 0
    %s22 = sadd.s32 %s21, 1
    %s23 = scalar_select %p20, %s21, %s22
    %p26 = pneg %p20
    %p27 = scmp.eq.s32.totalorder %s11, 1
    %p28 = por %p26, %p27
    %p29 = scmp.ne.s32.totalorder %s21, %s24
    %p30 = scmp.eq.s32.totalorder %s11, 0
    %p31 = por %p29, %p30
    %p32 = scmp.ne.s32.totalorder %s21, %s24
    %p33 = scmp.eq.s32.totalorder %s16, 1
    %p34 = por %p32, %p33
    %p35 = scmp.ne.s32.totalorder %s24, %s25
    %p36 = scmp.eq.s32.totalorder %s16, 0
    %p37 = por %p35, %p36
    %p38 = scmp.ne.s32.totalorder %s24, %s25
    %p39 = scmp.eq.s32.totalorder %s17, 1
    %p40 = por %p38, %p39
    %p42 = scmp.ne.s32.totalorder %s25, %s41
    %p43 = scmp.eq.s32.totalorder %s17, 0
    %p44 = por %p42, %p43
    %s46 = sadd.s32 %s45, 1
    %p49 = scmp.eq.s32.totalorder %s11, 1
    %p50 = scmp.ne.s32.totalorder %s45, %s47
    %p51 = scmp.eq.s32.totalorder %s11, 0
    %p52 = por %p50, %p51
    %p53 = scmp.ne.s32.totalorder %s45, %s47
    %p54 = scmp.eq.s32.totalorder %s16, 1
    %p55 = por %p53, %p54
    %p56 = scmp.ne.s32.totalorder %s47, %s48
    %p57 = scmp.eq.s32.totalorder %s16, 0
    %p58 = por %p56, %p57
    %p59 = scmp.ne.s32.totalorder %s47, %s48
    %p60 = scmp.eq.s32.totalorder %s17, 1
    %p61 = por %p59, %p60
    %p63 = scmp.ne.s32.totalorder %s48, %s62
    %p64 = scmp.eq.s32.totalorder %s17, 0
    %p65 = por %p63, %p64
    %s67 = sadd.s32 %s66, 1
    %p70 = scmp.eq.s32.totalorder %s11, 1
    %p71 = scmp.ne.s32.totalorder %s66, %s68
    %p72 = scmp.eq.s32.totalorder %s11, 0
    %p73 = por %p71, %p72
    %p74 = scmp.ne.s32.totalorder %s66, %s68
    %p75 = scmp.eq.s32.totalorder %s16, 1
    %p76 = por %p74, %p75
    %p77 = scmp.ne.s32.totalorder %s68, %s69
    %p78 = scmp.eq.s32.totalorder %s16, 0
    %p79 = por %p77, %p78
    %p80 = scmp.ne.s32.totalorder %s68, %s69
    %p81 = scmp.eq.s32.totalorder %s17, 1
    %p82 = por %p80, %p81
    %p84 = scmp.ne.s32.totalorder %s69, %s83
    %p85 = scmp.eq.s32.totalorder %s17, 0
    %p86 = por %p84, %p85
    %s87 = ssub.s32 %s11, %s18
    %p88 = scmp.eq.s32.totalorder %s87, 0
    %s90 = sadd.s32 %s89, 1
    %s91 = scalar_select %p88, %s89, %s90
    %p94 = pneg %p88
    %p95 = scmp.eq.s32.totalorder %s11, 1
    %p96 = por %p94, %p95
    %p97 = scmp.ne.s32.totalorder %s89, %s92
    %p98 = scmp.eq.s32.totalorder %s11, 0
    %p99 = por %p97, %p98
    %p100 = scmp.ne.s32.totalorder %s89, %s92
    %p101 = scmp.eq.s32.totalorder %s16, 1
    %p102 = por %p100, %p101
    %p103 = scmp.ne.s32.totalorder %s92, %s93
    %p104 = scmp.eq.s32.totalorder %s16, 0
    %p105 = por %p103, %p104
    %p106 = scmp.ne.s32.totalorder %s92, %s93
    %p107 = scmp.eq.s32.totalorder %s17, 1
    %p108 = por %p106, %p107
    %p110 = scmp.ne.s32.totalorder %s93, %s109
    %p111 = scmp.eq.s32.totalorder %s17, 0
    %p112 = por %p110, %p111
    %s113 = ssub.s32 %s11, %s18
    %p114 = scmp.eq.s32.totalorder %s113, 0
    %s116 = sadd.s32 %s115, 1
    %s117 = scalar_select %p114, %s115, %s116
    %p120 = pneg %p114
    %p121 = scmp.eq.s32.totalorder %s11, 1
    %p122 = por %p120, %p121
    %p123 = scmp.ne.s32.totalorder %s115, %s118
    %p124 = scmp.eq.s32.totalorder %s11, 0
    %p125 = por %p123, %p124
    %p126 = scmp.ne.s32.totalorder %s115, %s118
    %p127 = scmp.eq.s32.totalorder %s16, 1
    %p128 = por %p126, %p127
    %p129 = scmp.ne.s32.totalorder %s118, %s119
    %p130 = scmp.eq.s32.totalorder %s16, 0
    %p131 = por %p129, %p130
    %p132 = scmp.ne.s32.totalorder %s118, %s119
    %p133 = scmp.eq.s32.totalorder %s17, 1
    %p134 = por %p132, %p133
    %p136 = scmp.ne.s32.totalorder %s119, %s135
    %p137 = scmp.eq.s32.totalorder %s17, 0
    %p138 = por %p136, %p137
    %p139 = scmp.le.s32.totalorder 1, %s11
    %p140 = scmp.lt.s32.totalorder %s11, 3
    %p141 = pnand %p139, %p140
    %p142 = pneg %p141
    // Predicated region
    $region9: #{separable_conv_bn_relu.2} parent=5 // pred_check
      _
    $region10: #{separable_conv_bn_relu.2} parent=5 // pred_check_branch
      %144 = sbr.rel (%p141) target = $region12
    $region11: #{separable_conv_bn_relu.2} parent=5 // pred_region
      %s145 = ssub.s32 %s11, 1
      // Predicated region
      $region13: #{separable_conv_bn_relu.2} parent=11 // pred_check
        %p146 = pneg %p58
      $region14: #{separable_conv_bn_relu.2} parent=11 // pred_check_branch
        %148 = sbr.rel (%p146) target = $region16
      $region15: #{separable_conv_bn_relu.2} parent=11 // pred_region
        _
      $region16: #{separable_conv_bn_relu.2} parent=11 // pred_fallthru
        _
      // Predicated region
      $region17: #{separable_conv_bn_relu.2} parent=11 // pred_check
        %p149 = pneg %p79
      $region18: #{separable_conv_bn_relu.2} parent=11 // pred_check_branch
        %151 = sbr.rel (%p149) target = $region20
      $region19: #{separable_conv_bn_relu.2} parent=11 // pred_region
        _
      $region20: #{separable_conv_bn_relu.2} parent=11 // pred_fallthru
        _
    $region12: #{separable_conv_bn_relu.2} parent=5 // pred_fallthru
      _
    %p152 = scmp.lt.s32.totalorder %s11, 2
    // Predicated region
    $region21: #{separable_conv_bn_relu.2} parent=5 // pred_check
      %p153 = pneg %p152
    $region22: #{separable_conv_bn_relu.2} parent=5 // pred_check_branch
      %155 = sbr.rel (%p153) target = $region24
    $region23: #{separable_conv_bn_relu.2} parent=5 // pred_region
      // Predicated region
      $region25: #{separable_conv_bn_relu.2} parent=23 // pred_check
        %p156 = pneg %p31
      $region26: #{separable_conv_bn_relu.2} parent=23 // pred_check_branch
        %158 = sbr.rel (%p156) target = $region28
      $region27: #{separable_conv_bn_relu.2} parent=23 // pred_region
        %p159 = scmp.lt.s32.totalorder %s11, 1
        %s160 = scalar_select %p159, %s11, 1
        %s161 = smul.addr %s160, 3
        %s162 = smul.addr %s161, 4
        %s163 = scalar_lea.vmem %s0, %s162
      $region28: #{separable_conv_bn_relu.2} parent=23 // pred_fallthru
        _
    $region24: #{separable_conv_bn_relu.2} parent=5 // pred_fallthru
      _
    %p164 = scmp.le.s32.totalorder 1, %s11
    %p165 = scmp.lt.s32.totalorder %s11, 3
    %p166 = pnand %p164, %p165
    %p167 = pneg %p166
    // Predicated region
    $region29: #{separable_conv_bn_relu.2} parent=5 // pred_check
      _
    $region30: #{separable_conv_bn_relu.2} parent=5 // pred_check_branch
      %169 = sbr.rel (%p166) target = $region32
    $region31: #{separable_conv_bn_relu.2} parent=5 // pred_region
      %s170 = ssub.s32 %s11, 1
      %p171 = scmp.lt.s32.totalorder %s16, 1
      %s172 = scalar_select %p171, %s16, 1
      %s173 = smul.addr %s172, 3
      %s174 = smul.addr %s173, 4
      %s175 = scalar_lea.vmem %s0, %s174
      %p176 = pneg %p37
      %p177 = pneg %p34
      %p178 = pneg %p58
      %p179 = pneg %p55
      %p180 = pneg %p79
      %p181 = pneg %p76
      %p182 = pneg %p105
      %p183 = pneg %p102
      %p184 = scmp.lt.s32.totalorder %s16, 1
      %s185 = scalar_select %p184, %s16, 1
      %s186 = smul.addr %s185, 2
      %s187 = smul.addr %s186, 4
      %s188 = scalar_lea.vmem %s3, %s187
      %p189 = pneg %p131
      %p190 = pneg %p128
      %p191 = scmp.lt.s32.totalorder %s16, 1
      %s192 = scalar_select %p191, %s16, 1
      %s193 = smul.addr %s192, 2
      %s194 = scalar_lea.vmem %s4, %s193
      %p195 = scmp.lt.s32.totalorder %s16, 1
      %s196 = scalar_select %p195, %s16, 1
      %s197 = smul.addr %s196, 3
      %s198 = smul.addr %s197, 4
      %s199 = scalar_lea.vmem %s0, %s198
      %p200 = scmp.lt.s32.totalorder %s16, 1
      %s201 = scalar_select %p200, %s16, 1
      %s202 = smul.addr %s201, 2
      %s203 = smul.addr %s202, 4
      %s204 = scalar_lea.vmem %s3, %s203
      %p205 = scmp.lt.s32.totalorder %s16, 1
      %s206 = scalar_select %p205, %s16, 1
      %s207 = smul.addr %s206, 2
      %s208 = scalar_lea.vmem %s4, %s207
      %v210 = vld [vmem:[%s199] sm:$0xf]
      %v211 = vld [vmem:[%s199 + $0x4] sm:$0xf]
      %v212 = vld [vmem:[%s1] sm:$0xf]
      %v213 = vld [vmem:[%s1 + $0x4] sm:$0xf]
      %v214 = vld [vmem:[%s1 + $0x8] sm:$0xf]
      %v215 = vld [vmem:[%s1 + $0xc] sm:$0xf]
      %v216 = vld [vmem:[%s1 + $0x10] sm:$0xf]
      %v217 = vld [vmem:[%s1 + $0x14] sm:$0xf]
      %v218 = vld [vmem:[%s1 + $0x18] sm:$0xf]
      %v219 = vld [vmem:[%s1 + $0x1c] sm:$0xf]
      %v220 = vld [vmem:[%s1 + $0x20] sm:$0xf]
      %v221 = vld [vmem:[%s199 + $0x8] sm:$0x1]
      %s222 = scalar_lea.vmem %s1, 36
      %v223 = vld [vmem:[%s222] sm:$0xf]
      %v224 = vld [vmem:[%s222 + $0x4] sm:$0xf]
      %v225 = vld [vmem:[%s222 + $0x8] sm:$0xf]
      %v226 = vld [vmem:[%s222 + $0xc] sm:$0xf]
      %v227 = vld [vmem:[%s222 + $0x10] sm:$0xf]
      %v228 = vld [vmem:[%s222 + $0x14] sm:$0xf]
      %v229 = vld [vmem:[%s222 + $0x18] sm:$0xf]
      %v230 = vld [vmem:[%s222 + $0x1c] sm:$0xf]
      %v231 = vld [vmem:[%s222 + $0x20] sm:$0xf]
      %v235 = vunpack.c.l.b16 %v210
      %v236 = vunpack.c.l.b16 %v211
      %v237 = vunpack.c.l.b16 %v221
      %v238 = vpack.c.b16 %v236, %v235
      %v239 = vpack.c.b16 %v237, %v237
      %vm240 = vsmask.f32 7424
      %v242 = vshrl.u32 %v238, 16
      %v244 = vshll.u32 %v238, 16
      %v246 = vrot.slane %v244, 1
      %v247 = vor.u32 %v242, %v246
      %v249 = vshll.u32 %v239, 16
      %v251 = vrot.slane %v249, 1
      %v252 = vsel %vm240, %v247, %v251
      %v262 = vunpack.c.l.b16 %v223
      %v263 = vunpack.c.l.b16 %v224
      %v264 = vunpack.c.l.b16 %v225
      %v265 = vunpack.c.l.b16 %v226
      %v266 = vunpack.c.l.b16 %v227
      %v267 = vunpack.c.l.b16 %v228
      %v268 = vunpack.c.l.b16 %v229
      %v269 = vunpack.c.l.b16 %v230
      %v270 = vunpack.c.l.b16 %v231
      %v271 = vpack.c.b16 %v263, %v262
      %v272 = vpack.c.b16 %v265, %v264
      %v273 = vpack.c.b16 %v267, %v266
      %v274 = vpack.c.b16 %v269, %v268
      %v275 = vpack.c.b16 %v270, %v270
      %vm280 = vcmask 588800
      %v282 = vsel %vm280, %v252, 0
      %vm284 = vcmask 1043456
      %v286 = vsel %vm284, %v275, 0
      %288 = vmatprep.subr.bf16.mxu0 0
      %289 = vmatpush1.bf16.msra.mxu0 0
      %290 = vmatprep.subr.bf16.mxu0 0
      %291 = vmatpush1.bf16.msra.mxu0 0
      %292 = vmatprep.subr.bf16.mxu0 0
      %293 = vmatpush1.bf16.msra.mxu0 0
      %294 = vmatprep.subr.bf16.mxu0 0
      %295 = vmatpush1.bf16.msra.mxu0 %v286
      %296 = vmatprep.subr.bf16.mxu0 0
      %297 = vmatpush1.bf16.msra.mxu0 %v274
      %298 = vmatprep.subr.bf16.mxu0 0
      %299 = vmatpush1.bf16.msra.mxu0 %v273
      %300 = vmatprep.subr.bf16.mxu0 0
      %301 = vmatpush1.bf16.msra.mxu0 %v272
      %302 = vmatprep.subr.bf16.mxu0 0
      %303 = vmatpush1.bf16.msra.mxu0 %v271
      %304 = vmatprep.subr.bf16.mxu0 0
      %305 = vmatpush2.bf16.msra.mxu0 0
      %306 = vmatprep.subr.bf16.mxu0 0
      %307 = vmatpush2.bf16.msra.mxu0 0
      %308 = vmatprep.subr.bf16.mxu0 0
      %309 = vmatpush2.bf16.msra.mxu0 0
      %310 = vmatprep.subr.bf16.mxu0 0
      %311 = vmatpush2.bf16.msra.mxu0 0
      %312 = vmatprep.subr.bf16.mxu0 0
      %313 = vmatpush2.bf16.msra.mxu0 0
      %314 = vmatprep.subr.bf16.mxu0 0
      %315 = vmatpush2.bf16.msra.mxu0 0
      %316 = vmatprep.subr.bf16.mxu0 0
      %317 = vmatpush2.bf16.msra.mxu0 0
      %318 = vmatprep.subr.bf16.mxu0 0
      %319 = vmatpush2.bf16.msra.mxu0 0
      %320 = vmatprep.mubr.bf16.mxu0 0
      %321 = vmatmul.mubr.bf16.gmra.mxu0 %v282
      %v322 = vpop.f32.mrf.mxu0
      %v323 = vadd.f32 0.0, %v322
      %v324 = vpop.f32.mrf.mxu0
      %v325 = vpop.f32.mrf.mxu0
      %v326 = vadd.f32 0.0, %v325
      %v327 = vpop.f32.mrf.mxu0
      %328 = vdwg.mxu0
      %v338 = vunpack.c.l.b16 %v212
      %v339 = vunpack.c.l.b16 %v213
      %v340 = vunpack.c.l.b16 %v214
      %v341 = vunpack.c.l.b16 %v215
      %v342 = vunpack.c.l.b16 %v216
      %v343 = vunpack.c.l.b16 %v217
      %v344 = vunpack.c.l.b16 %v218
      %v345 = vunpack.c.l.b16 %v219
      %v346 = vunpack.c.l.b16 %v220
      %v347 = vpack.c.b16 %v339, %v338
      %v348 = vpack.c.b16 %v341, %v340
      %v349 = vpack.c.b16 %v343, %v342
      %v350 = vpack.c.b16 %v345, %v344
      %v351 = vpack.c.b16 %v346, %v346
      %v356 = vsel %vm280, %v238, 0
      %v359 = vsel %vm284, %v351, 0
      %361 = vmatprep.subr.bf16.mxu0 0
      %362 = vmatpush1.bf16.msra.mxu0 0
      %363 = vmatprep.subr.bf16.mxu0 0
      %364 = vmatpush1.bf16.msra.mxu0 0
      %365 = vmatprep.subr.bf16.mxu0 0
      %366 = vmatpush1.bf16.msra.mxu0 0
      %367 = vmatprep.subr.bf16.mxu0 0
      %368 = vmatpush1.bf16.msra.mxu0 %v359
      %369 = vmatprep.subr.bf16.mxu0 0
      %370 = vmatpush1.bf16.msra.mxu0 %v350
      %371 = vmatprep.subr.bf16.mxu0 0
      %372 = vmatpush1.bf16.msra.mxu0 %v349
      %373 = vmatprep.subr.bf16.mxu0 0
      %374 = vmatpush1.bf16.msra.mxu0 %v348
      %375 = vmatprep.subr.bf16.mxu0 0
      %376 = vmatpush1.bf16.msra.mxu0 %v347
      %377 = vmatprep.subr.bf16.mxu0 0
      %378 = vmatpush2.bf16.msra.mxu0 0
      %379 = vmatprep.subr.bf16.mxu0 0
      %380 = vmatpush2.bf16.msra.mxu0 0
      %381 = vmatprep.subr.bf16.mxu0 0
      %382 = vmatpush2.bf16.msra.mxu0 0
      %383 = vmatprep.subr.bf16.mxu0 0
      %384 = vmatpush2.bf16.msra.mxu0 0
      %385 = vmatprep.subr.bf16.mxu0 0
      %386 = vmatpush2.bf16.msra.mxu0 0
      %387 = vmatprep.subr.bf16.mxu0 0
      %388 = vmatpush2.bf16.msra.mxu0 0
      %389 = vmatprep.subr.bf16.mxu0 0
      %390 = vmatpush2.bf16.msra.mxu0 0
      %391 = vmatprep.subr.bf16.mxu0 0
      %392 = vmatpush2.bf16.msra.mxu0 0
      %393 = vmatprep.mubr.bf16.mxu0 0
      %394 = vmatmul.mubr.bf16.gmra.mxu0 %v356
      %v395 = vpop.f32.mrf.mxu0
      %v396 = vadd.f32 %v323, %v395
      %v397 = vpop.f32.mrf.mxu0
      %v398 = vpop.f32.mrf.mxu0
      %v399 = vadd.f32 %v326, %v398
      %v400 = vpop.f32.mrf.mxu0
      %401 = vdwg.mxu0
      %v402 = vld [vmem:[%s199] sm:$0xe]
      %s403 = scalar_lea.vmem %s1, 72
      %v404 = vld [vmem:[%s403] sm:$0xf]
      %v405 = vld [vmem:[%s403 + $0x4] sm:$0xf]
      %v406 = vld [vmem:[%s403 + $0x8] sm:$0xf]
      %v407 = vld [vmem:[%s403 + $0xc] sm:$0xf]
      %v408 = vld [vmem:[%s403 + $0x10] sm:$0xf]
      %v409 = vld [vmem:[%s403 + $0x14] sm:$0xf]
      %v410 = vld [vmem:[%s403 + $0x18] sm:$0xf]
      %v411 = vld [vmem:[%s403 + $0x1c] sm:$0xf]
      %v412 = vld [vmem:[%s403 + $0x20] sm:$0xf]
      %v414 = vunpack.c.l.b16 %v402
      %v415 = vpack.c.b16 %v236, %v414
      %vm416 = vcmask 1046528
      %v417 = vrot.slane %v415, 1
      %v418 = vrot.slane %v239, 1
      %v419 = vsel %vm416, %v417, %v418
      %v429 = vunpack.c.l.b16 %v404
      %v430 = vunpack.c.l.b16 %v405
      %v431 = vunpack.c.l.b16 %v406
      %v432 = vunpack.c.l.b16 %v407
      %v433 = vunpack.c.l.b16 %v408
      %v434 = vunpack.c.l.b16 %v409
      %v435 = vunpack.c.l.b16 %v410
      %v436 = vunpack.c.l.b16 %v411
      %v437 = vunpack.c.l.b16 %v412
      %v438 = vpack.c.b16 %v430, %v429
      %v439 = vpack.c.b16 %v432, %v431
      %v440 = vpack.c.b16 %v434, %v433
      %v441 = vpack.c.b16 %v436, %v435
      %v442 = vpack.c.b16 %v437, %v437
      %v448 = vsel %vm280, %v419, 0
      %v451 = vsel %vm284, %v442, 0
      %453 = vmatprep.subr.bf16.mxu0 0
      %454 = vmatpush1.bf16.msra.mxu0 0
      %455 = vmatprep.subr.bf16.mxu0 0
      %456 = vmatpush1.bf16.msra.mxu0 0
      %457 = vmatprep.subr.bf16.mxu0 0
      %458 = vmatpush1.bf16.msra.mxu0 0
      %459 = vmatprep.subr.bf16.mxu0 0
      %460 = vmatpush1.bf16.msra.mxu0 %v451
      %461 = vmatprep.subr.bf16.mxu0 0
      %462 = vmatpush1.bf16.msra.mxu0 %v441
      %463 = vmatprep.subr.bf16.mxu0 0
      %464 = vmatpush1.bf16.msra.mxu0 %v440
      %465 = vmatprep.subr.bf16.mxu0 0
      %466 = vmatpush1.bf16.msra.mxu0 %v439
      %467 = vmatprep.subr.bf16.mxu0 0
      %468 = vmatpush1.bf16.msra.mxu0 %v438
      %469 = vmatprep.subr.bf16.mxu0 0
      %470 = vmatpush2.bf16.msra.mxu0 0
      %471 = vmatprep.subr.bf16.mxu0 0
      %472 = vmatpush2.bf16.msra.mxu0 0
      %473 = vmatprep.subr.bf16.mxu0 0
      %474 = vmatpush2.bf16.msra.mxu0 0
      %475 = vmatprep.subr.bf16.mxu0 0
      %476 = vmatpush2.bf16.msra.mxu0 0
      %477 = vmatprep.subr.bf16.mxu0 0
      %478 = vmatpush2.bf16.msra.mxu0 0
      %479 = vmatprep.subr.bf16.mxu0 0
      %480 = vmatpush2.bf16.msra.mxu0 0
      %481 = vmatprep.subr.bf16.mxu0 0
      %482 = vmatpush2.bf16.msra.mxu0 0
      %483 = vmatprep.subr.bf16.mxu0 0
      %484 = vmatpush2.bf16.msra.mxu0 0
      %485 = vmatprep.mubr.bf16.mxu0 0
      %486 = vmatmul.mubr.bf16.gmra.mxu0 %v448
      %v487 = vpop.f32.mrf.mxu0
      %v488 = vadd.f32 0.0, %v487
      %v489 = vpop.f32.mrf.mxu0
      %v490 = vpop.f32.mrf.mxu0
      %v491 = vadd.f32 0.0, %v490
      %v492 = vpop.f32.mrf.mxu0
      %493 = vdwg.mxu0
      %v494 = vadd.f32 %v396, %v488
      %v495 = vadd.f32 %v399, %v491
      %v496 = vld [vmem:[%s2] sm:$0x1]
      %v498 = vlaneseq
      %v499 = vshrl.u32 %v498, 7
      %v500 = vsub.s32 0, %v499
      %v501 = vrot.slane %v496, %v500
      %v503 = vadd.f32 %v494, %v501
      %v504 = vadd.f32 %v495, %v501
      %v505 = vpack.c.bf16 %v504, %v503
      %v507 = vunpack.c.l.b16 %v505
      %v508 = vunpack.c.h.b16 %v505
      %v509 = vpack.c.b16 %v507, %v507
      %v510 = vpack.c.b16 %v508, %v508
      %513 = vst [vmem:[%s204] sm:$0xf] %v509
      %514 = vst [vmem:[%s204 + $0x4] sm:$0xf] %v510
      %v515 = vadd.f32 %v503, %v504
      %v516 = vrot.slane %v515, 4
      %v517 = vadd.f32 %v515, %v516
      %v518 = vrot.slane %v517, 2
      %v519 = vadd.f32 %v517, %v518
      %v520 = vrot.slane %v519, 1
      %v521 = vadd.f32 %v519, %v520
      %v522 = vadd.f32 %v521, 0.0
      %v523 = vmul.f32 %v503, %v503
      %v524 = vmul.f32 %v504, %v504
      %v525 = vadd.f32 %v523, %v524
      %v526 = vrot.slane %v525, 4
      %v527 = vadd.f32 %v525, %v526
      %v528 = vrot.slane %v527, 2
      %v529 = vadd.f32 %v527, %v528
      %v530 = vrot.slane %v529, 1
      %v531 = vadd.f32 %v529, %v530
      %v532 = vadd.f32 %v531, 0.0
      %533 = vst [vmem:[%s208] sm:$0x1] %v522
      %534 = vst [vmem:[%s208 + $0x1] sm:$0x1] %v532
      %p535 = scmp.lt.s32.totalorder %s16, 1
      %s536 = scalar_select %p535, %s16, 1
      %s537 = smul.addr %s536, 2
      %s538 = smul.addr %s537, 4
      %s539 = scalar_lea.vmem %s3, %s538
      %p540 = scmp.lt.s32.totalorder %s16, 1
      %s541 = scalar_select %p540, %s16, 1
      %s542 = smul.addr %s541, 2
      %s543 = scalar_lea.vmem %s4, %s542
      // Predicated region
      $region33: #{separable_conv_bn_relu.2} parent=31 // pred_check
        %p544 = pneg %p102
      $region34: #{separable_conv_bn_relu.2} parent=31 // pred_check_branch
        %546 = sbr.rel (%p544) target = $region36
      $region35: #{separable_conv_bn_relu.2} parent=31 // pred_region
        _
      $region36: #{separable_conv_bn_relu.2} parent=31 // pred_fallthru
        _
      // Predicated region
      $region37: #{separable_conv_bn_relu.2} parent=31 // pred_check
        %p547 = pneg %p128
      $region38: #{separable_conv_bn_relu.2} parent=31 // pred_check_branch
        %549 = sbr.rel (%p547) target = $region40
      $region39: #{separable_conv_bn_relu.2} parent=31 // pred_region
        _
      $region40: #{separable_conv_bn_relu.2} parent=31 // pred_fallthru
        _
    $region32: #{separable_conv_bn_relu.2} parent=5 // pred_fallthru
      _
    %p550 = scmp.le.s32.totalorder 2, %s11
    // Predicated region
    $region41: #{separable_conv_bn_relu.2} parent=5 // pred_check
      %p551 = pneg %p550
    $region42: #{separable_conv_bn_relu.2} parent=5 // pred_check_branch
      %553 = sbr.rel (%p551) target = $region44
    $region43: #{separable_conv_bn_relu.2} parent=5 // pred_region
      %s554 = ssub.s32 %s11, 2
      // Predicated region
      $region45: #{separable_conv_bn_relu.2} parent=43 // pred_check
        %p555 = pneg %p108
      $region46: #{separable_conv_bn_relu.2} parent=43 // pred_check_branch
        %557 = sbr.rel (%p555) target = $region48
      $region47: #{separable_conv_bn_relu.2} parent=43 // pred_region
        %p558 = scmp.lt.s32.totalorder %s17, 1
        %s559 = scalar_select %p558, %s17, 1
        %s560 = smul.addr %s559, 2
        %s561 = smul.addr %s560, 4
        %s562 = scalar_lea.vmem %s3, %s561
      $region48: #{separable_conv_bn_relu.2} parent=43 // pred_fallthru
        _
      // Predicated region
      $region49: #{separable_conv_bn_relu.2} parent=43 // pred_check
        %p563 = pneg %p134
      $region50: #{separable_conv_bn_relu.2} parent=43 // pred_check_branch
        %565 = sbr.rel (%p563) target = $region52
      $region51: #{separable_conv_bn_relu.2} parent=43 // pred_region
        %p566 = scmp.lt.s32.totalorder %s17, 1
        %s567 = scalar_select %p566, %s17, 1
        %s568 = smul.addr %s567, 2
        %s569 = scalar_lea.vmem %s4, %s568
      $region52: #{separable_conv_bn_relu.2} parent=43 // pred_fallthru
        _
    $region44: #{separable_conv_bn_relu.2} parent=5 // pred_fallthru
      _
  $region6: #{separable_conv_bn_relu.2} parent=0 // loop_footer
    %s15 = sadd.s32 1, %s11
  $region7: #{separable_conv_bn_relu.2} parent=0 // loop_footer_branch
    %10 = sbr.rel target = $region3
  $region8: #{separable_conv_bn_relu.2} parent=0 // loop_exit
    _

</llo_original>
